<compile_context>
chip_gen: v7x
topology: tpu7x:2x2x1
jax: 0.10.0
libtpu: 0.0.40
codegen_flags: <defaults>
</compile_context>

<pallas_src>
import jax
import jax.numpy as jnp
from jax.experimental import pallas as pl
from jax.experimental.pallas import tpu as pltpu


def _round_up(n, m=128):
    return ((n + m - 1) // m) * m


# ----------------------------------------------------------------------------
# Kernel: (folded conv+flatten+lin1) -> [Linear + LeakyReLU(0.2)]* -> Linear
# ----------------------------------------------------------------------------
def make_kernel(n_hidden_layers):
    def kernel(x_ref, weff_ref, beff_ref, *rest):
        # x_ref   : (TB, H*W)   f32  activation tile (one per grid step)
        # weff_ref: (H*W, Hp)   bf16 folded conv+flatten+lin1 weight (resident)
        # beff_ref: (1, Hp)     f32  folded bias (resident)
        # rest    : [whT_i, bh_i] * n_hidden_layers, woT, bo, out
        hid_refs = rest[:2 * n_hidden_layers]
        woT_ref = rest[2 * n_hidden_layers]
        bo_ref = rest[2 * n_hidden_layers + 1]
        o_ref = rest[2 * n_hidden_layers + 2]

        w_eff = weff_ref[...]
        x = x_ref[...].astype(w_eff.dtype)
        # conv3x3 + flatten + lin1 (folded): one MXU matmul, f32 accumulation.
        h = jnp.dot(x, w_eff, preferred_element_type=jnp.float32) + beff_ref[...]

        # Hidden layers: Linear + LeakyReLU(0.2). Zero-padded lanes stay exactly 0
        # (padded weight rows/cols and bias lanes are zero; LeakyReLU(0) == 0).
        for i in range(n_hidden_layers):
            whT = hid_refs[2 * i][...]
            bh = hid_refs[2 * i + 1][...]
            h = jnp.dot(h.astype(whT.dtype), whT,
                        preferred_element_type=jnp.float32) + bh
            h = jnp.where(h >= 0, h, 0.2 * h)          # f32 VPU (v5e-safe)

        # Output layer (lane-dense: n_features = H*W = 256 = 2x128 lanes).
        woT = woT_ref[...]
        o_ref[...] = (jnp.dot(h.astype(woT.dtype), woT,
                              preferred_element_type=jnp.float32)
                      + bo_ref[...]).astype(o_ref.dtype)

    return kernel


# ----------------------------------------------------------------------------
# One-time parameter prep:
#  * fold conv3x3(same, C_in=1) + NCHW-flatten + lin1 into (W_eff, b_eff)
#  * transpose + zero-pad hidden dims to 128 lanes
#  * cast MXU weights to bf16 (biases stay f32)
# ----------------------------------------------------------------------------
def prepare_params(params, H, W, weight_dtype=jnp.bfloat16):
    f32 = jnp.float32
    HW = H * W
    C = params["conv_b"].shape[0]
    h0 = params["w1"].shape[0]
    h0p = _round_up(h0)

    # Conv (no bias) -> NCHW flatten is a fixed linear map x[HW] -> y[C*HW].
    # Build its matrix A by pushing the HW unit images through the conv once.
    eye_imgs = jnp.eye(HW, dtype=f32).reshape(HW, 1, H, W)
    conv_resp = jax.lax.conv_general_dilated(
        eye_imgs, jnp.expand_dims(params["conv_w"].astype(f32), 1),  # (C,1,3,3)
        window_strides=(1, 1), padding="SAME",
        dimension_numbers=("NCHW", "OIHW", "NCHW"))                  # (HW, C, H, W)
    A = conv_resp.reshape(HW, C * HW)                 # rows: input pos q; NCHW flatten cols
    w1T = params["w1"].T.astype(f32)                  # (C*HW, h0)

    w_eff = A @ w1T                                   # (HW, h0)
    bias_flat = jnp.repeat(params["conv_b"].astype(f32), HW)          # (C*HW,)
    b_eff = params["b1"].astype(f32) + bias_flat @ w1T                # (h0,)

    prepped = {
        "W_eff": jnp.pad(w_eff, ((0, 0), (0, h0p - h0))).astype(weight_dtype),
        "b_eff": jnp.pad(b_eff, (0, h0p - h0)).reshape(1, -1),        # f32
        "whT": [], "bh": [],
    }

    prev, prev_p = h0, h0p
    for wh, bh in zip(params["wh"], params["bh"]):
        dout = wh.shape[0]
        dout_p = _round_up(dout)
        prepped["whT"].append(
            jnp.pad(wh.T.astype(f32),
                    ((0, prev_p - prev), (0, dout_p - dout))).astype(weight_dtype))
        prepped["bh"].append(
            jnp.pad(bh.astype(f32), (0, dout_p - dout)).reshape(1, -1))
        prev, prev_p = dout, dout_p

    prepped["woT"] = jnp.pad(params["wo"].T.astype(f32),
                             ((0, prev_p - prev), (0, 0))).astype(weight_dtype)
    prepped["bo"] = params["bo"].astype(f32).reshape(1, -1)
    return prepped


# ----------------------------------------------------------------------------
# Forward pass: one pallas_call, batch grid with VMEM-resident weights
# ----------------------------------------------------------------------------
def my_autoenc_forward(x_nchw, prepped, H, W, *, tb_max=1024, vmem_limit_bytes=None):
    B, c_in = x_nchw.shape[:2]
    assert c_in == 1, "myAutoenc conv expects a single input channel"
    HW = H * W
    n_feat = prepped["bo"].shape[1]
    n_hidden_layers = len(prepped["whT"])

    x_flat = x_nchw.reshape(B, HW).astype(jnp.float32)   # metadata-only (C_in == 1)

    # Batch tiling: one "parallel" grid axis; tb_max=1024 keeps double-buffered
    # f32 in/out blocks ~4 MB, well inside even v5e's 16 MiB scoped VMEM default.
    if B <= tb_max:
        TB, Bp = B, B                      # single block == full batch dim
    else:
        TB = tb_max                        # multiple of 8 -> (8,128) tiling ok
        Bp = ((B + TB - 1) // TB) * TB
        x_flat = jnp.pad(x_flat, ((0, Bp - B), (0, 0)))
    grid = (Bp // TB,)

    weights = [prepped["W_eff"], prepped["b_eff"]]
    for whT, bh in zip(prepped["whT"], prepped["bh"]):
        weights += [whT, bh]
    weights += [prepped["woT"], prepped["bo"]]

    in_specs = (
        [pl.BlockSpec((TB, HW), lambda i: (i, 0))]                    # x tile per step
        # Weights/biases: full-shape blocks pinned to block 0 -> VMEM-resident
        # across all grid steps (no re-DMA).
        + [pl.BlockSpec(w.shape, lambda i: (0, 0)) for w in weights]
    )
    out_specs = pl.BlockSpec((TB, n_feat), lambda i: (i, 0))

    # Advisory cost estimate, reflecting folded weights and actual dtypes.
    flops = 2 * Bp * HW * prepped["W_eff"].shape[1]
    for whT in prepped["whT"]:
        flops += 2 * Bp * whT.shape[0] * whT.shape[1]
    flops += 2 * Bp * prepped["woT"].shape[0] * n_feat
    bytes_accessed = (Bp * HW * 4 + Bp * n_feat * 4
                      + sum(int(w.size) * w.dtype.itemsize for w in weights))

    out = pl.pallas_call(
        make_kernel(n_hidden_layers),
        out_shape=jax.ShapeDtypeStruct((Bp, n_feat), jnp.float32),
        grid=grid,
        in_specs=in_specs,
        out_specs=out_specs,
        compiler_params=pltpu.CompilerParams(
            dimension_semantics=("parallel",),          # megacore on v7x, pipelining elsewhere
            vmem_limit_bytes=vmem_limit_bytes),
        cost_estimate=pl.CostEstimate(flops=int(flops), transcendentals=0,
                                      bytes_accessed=int(bytes_accessed)),
    )(x_flat, *weights)
    return out[:B]


# ----------------------------------------------------------------------------
# Parameter init (deterministic, PyTorch-default-style uniform(-1/sqrt(fan_in), ..))
# ----------------------------------------------------------------------------
def init_params(key, n_features, hidden_dims, conv_chan):
    def uni(k, shape, fan_in):
        bound = 1.0 / jnp.sqrt(jnp.float32(fan_in))
        return jax.random.uniform(k, shape, jnp.float32, -bound, bound)

    keys = jax.random.split(key, 8 + 2 * len(hidden_dims))
    ki = iter(keys)
    p = {}
    p["conv_w"] = uni(next(ki), (conv_chan, 3, 3), 1 * 3 * 3)       # Conv2d(1, C, 3)
    p["conv_b"] = uni(next(ki), (conv_chan,), 1 * 3 * 3)
    d_in = n_features * conv_chan
    p["w1"] = uni(next(ki), (hidden_dims[0], d_in), d_in)           # lin1
    p["b1"] = uni(next(ki), (hidden_dims[0],), d_in)
    p["wh"], p["bh"] = [], []
    for i in range(len(hidden_dims) - 1):                           # hidden_layers
        p["wh"].append(uni(next(ki), (hidden_dims[i + 1], hidden_dims[i]), hidden_dims[i]))
        p["bh"].append(uni(next(ki), (hidden_dims[i + 1],), hidden_dims[i]))
    p["wo"] = uni(next(ki), (n_features, hidden_dims[-1]), hidden_dims[-1])  # output
    p["bo"] = uni(next(ki), (n_features,), hidden_dims[-1])
    return p


# ----------------------------------------------------------------------------
# Pure-JAX f32 reference (mirrors the PyTorch module exactly)
# ----------------------------------------------------------------------------
def reference_forward(x_nchw, params):
    y = jax.lax.conv_general_dilated(
        x_nchw, jnp.expand_dims(params["conv_w"], 1),   # (C_out, C_in=1, 3, 3)
        window_strides=(1, 1), padding="SAME",
        dimension_numbers=("NCHW", "OIHW", "NCHW"),
    ) + params["conv_b"].reshape(1, -1, 1, 1)
    h = y.reshape(y.shape[0], -1)
    h = h @ params["w1"].T + params["b1"]
    for wh, bh in zip(params["wh"], params["bh"]):
        h = h @ wh.T + bh
        h = jnp.where(h >= 0, h, 0.2 * h)
    return h @ params["wo"].T + params["bo"]


if __name__ == "__main__":
    B, H, W = 2, 16, 16
    n_features = H * W           # 256
    hidden_dims = (4, 4)         # module default
    conv_chan = 5                # module default

    key = jax.random.PRNGKey(0)
    k_x, k_p = jax.random.split(key)
    x = jax.random.normal(k_x, (B, 1, H, W), jnp.float32)
    params = init_params(k_p, n_features, hidden_dims, conv_chan)

    ref = reference_forward(x, params)

    # 1) f32-weight path: folded kernel must match the module reference tightly.
    prepped_f32 = prepare_params(params, H, W, weight_dtype=jnp.float32)
    out_f32 = jax.block_until_ready(my_autoenc_forward(x, prepped_f32, H, W))
    assert out_f32.shape == (B, n_features)
    assert jnp.allclose(out_f32, ref, atol=1e-4, rtol=1e-4), "f32 mismatch vs reference"

    # 2) bf16-MXU-weight path (recommended deployment config): f32 accumulation;
    #    tolerance covers bf16 weight/activation rounding (~0.4% per value).
    prepped_bf16 = prepare_params(params, H, W, weight_dtype=jnp.bfloat16)
    out_bf16 = jax.block_until_ready(my_autoenc_forward(x, prepped_bf16, H, W))
    assert out_bf16.shape == (B, n_features)
    scale = jnp.max(jnp.abs(ref))
    err = jnp.max(jnp.abs(out_bf16 - ref))
    assert err <= 2e-2 * scale + 1e-3, f"bf16 mismatch: max err {err} vs scale {scale}"

    print("KERNEL_OK")
</pallas_src>

<mosaic_0001>
module attributes {stable_mosaic.version = 11 : i64} {
  func.func @kernel(%arg0: i32, %arg1: memref<2x256xf32, #tpu.memory_space<vmem>>, %arg2: memref<256x128xf32, #tpu.memory_space<vmem>>, %arg3: memref<1x128xf32, #tpu.memory_space<vmem>>, %arg4: memref<128x128xf32, #tpu.memory_space<vmem>>, %arg5: memref<1x128xf32, #tpu.memory_space<vmem>>, %arg6: memref<128x256xf32, #tpu.memory_space<vmem>>, %arg7: memref<1x256xf32, #tpu.memory_space<vmem>>, %arg8: memref<2x256xf32, #tpu.memory_space<vmem>>) attributes {dimension_semantics = [#tpu.dimension_semantics<parallel>], iteration_bounds = array<i64: 1>, scalar_prefetch = 0 : i64, scratch_operands = 0 : i64, tpu.core_type = #tpu.core_type<tc>, window_params = [{transform_indices = @transform_0, window_bounds = array<i64: 2, 256>}, {pipeline_mode = #tpu.pipeline_mode<synchronous>, transform_indices = @transform_1, window_bounds = array<i64: 256, 128>}, {pipeline_mode = #tpu.pipeline_mode<synchronous>, transform_indices = @transform_2, window_bounds = array<i64: 1, 128>}, {pipeline_mode = #tpu.pipeline_mode<synchronous>, transform_indices = @transform_3, window_bounds = array<i64: 128, 128>}, {pipeline_mode = #tpu.pipeline_mode<synchronous>, transform_indices = @transform_4, window_bounds = array<i64: 1, 128>}, {pipeline_mode = #tpu.pipeline_mode<synchronous>, transform_indices = @transform_5, window_bounds = array<i64: 128, 256>}, {pipeline_mode = #tpu.pipeline_mode<synchronous>, transform_indices = @transform_6, window_bounds = array<i64: 1, 256>}, {transform_indices = @transform_7, window_bounds = array<i64: 2, 256>}]} {
    %c0 = arith.constant 0 : index
    %c0_0 = arith.constant 0 : index
    %0 = vector.load %arg2[%c0, %c0_0] : memref<256x128xf32, #tpu.memory_space<vmem>>, vector<256x128xf32>
    %c0_1 = arith.constant 0 : index
    %c0_2 = arith.constant 0 : index
    %1 = vector.load %arg1[%c0_1, %c0_2] : memref<2x256xf32, #tpu.memory_space<vmem>>, vector<2x256xf32>
    %cst = arith.constant dense<0.000000e+00> : vector<2x128xf32>
    %2 = tpu.matmul %1, %0, %cst {dimension_numbers = #tpu.dot_dimension_numbers<[1], [0], [0], [1], [0, 0, 1, 1], [], []>} : vector<2x256xf32>, vector<256x128xf32>, vector<2x128xf32> -> vector<2x128xf32>
    %c0_3 = arith.constant 0 : index
    %c0_4 = arith.constant 0 : index
    %3 = vector.load %arg3[%c0_3, %c0_4] : memref<1x128xf32, #tpu.memory_space<vmem>>, vector<1x128xf32>
    %4 = vector.broadcast %3 : vector<1x128xf32> to vector<2x128xf32>
    %5 = arith.addf %2, %4 : vector<2x128xf32>
    %c0_5 = arith.constant 0 : index
    %c0_6 = arith.constant 0 : index
    %6 = vector.load %arg4[%c0_5, %c0_6] : memref<128x128xf32, #tpu.memory_space<vmem>>, vector<128x128xf32>
    %c0_7 = arith.constant 0 : index
    %c0_8 = arith.constant 0 : index
    %7 = vector.load %arg5[%c0_7, %c0_8] : memref<1x128xf32, #tpu.memory_space<vmem>>, vector<1x128xf32>
    %cst_9 = arith.constant dense<0.000000e+00> : vector<2x128xf32>
    %8 = tpu.matmul %5, %6, %cst_9 {dimension_numbers = #tpu.dot_dimension_numbers<[1], [0], [0], [1], [0, 0, 1, 1], [], []>} : vector<2x128xf32>, vector<128x128xf32>, vector<2x128xf32> -> vector<2x128xf32>
    %9 = vector.broadcast %7 : vector<1x128xf32> to vector<2x128xf32>
    %10 = arith.addf %8, %9 : vector<2x128xf32>
    %cst_10 = arith.constant 0.000000e+00 : f32
    %11 = vector.broadcast %cst_10 : f32 to vector<2x128xf32>
    %12 = arith.cmpf oge, %10, %11 : vector<2x128xf32>
    %cst_11 = arith.constant 2.000000e-01 : f32
    %13 = vector.broadcast %cst_11 : f32 to vector<2x128xf32>
    %14 = arith.mulf %13, %10 : vector<2x128xf32>
    %15 = arith.select %12, %10, %14 : vector<2x128xi1>, vector<2x128xf32>
    %c0_12 = arith.constant 0 : index
    %c0_13 = arith.constant 0 : index
    %16 = vector.load %arg6[%c0_12, %c0_13] : memref<128x256xf32, #tpu.memory_space<vmem>>, vector<128x256xf32>
    %cst_14 = arith.constant dense<0.000000e+00> : vector<2x256xf32>
    %17 = tpu.matmul %15, %16, %cst_14 {dimension_numbers = #tpu.dot_dimension_numbers<[1], [0], [0], [1], [0, 0, 1, 1], [], []>} : vector<2x128xf32>, vector<128x256xf32>, vector<2x256xf32> -> vector<2x256xf32>
    %c0_15 = arith.constant 0 : index
    %c0_16 = arith.constant 0 : index
    %18 = vector.load %arg7[%c0_15, %c0_16] : memref<1x256xf32, #tpu.memory_space<vmem>>, vector<1x256xf32>
    %19 = vector.broadcast %18 : vector<1x256xf32> to vector<2x256xf32>
    %20 = arith.addf %17, %19 : vector<2x256xf32>
    %c0_17 = arith.constant 0 : index
    %c0_18 = arith.constant 0 : index
    %21 = vector.load %arg8[%c0_17, %c0_18] : memref<2x256xf32, #tpu.memory_space<vmem>>, vector<2x256xf32>
    tpu.vector_store %arg8[%c0_17, %c0_18], %20 {strides = array<i32>} : memref<2x256xf32, #tpu.memory_space<vmem>>, vector<2x256xf32>,
    return
  }
  func.func @transform_0(%arg0: i32) -> (i32, i32) {
    %c0_i32 = arith.constant 0 : i32
    %c0_i32_0 = arith.constant 0 : i32
    return %arg0, %c0_i32 : i32, i32
  }
  func.func @transform_1(%arg0: i32) -> (i32, i32) {
    %c0_i32 = arith.constant 0 : i32
    %c0_i32_0 = arith.constant 0 : i32
    %c0_i32_1 = arith.constant 0 : i32
    return %c0_i32, %c0_i32_0 : i32, i32
  }
  func.func @transform_2(%arg0: i32) -> (i32, i32) {
    %c0_i32 = arith.constant 0 : i32
    %c0_i32_0 = arith.constant 0 : i32
    %c0_i32_1 = arith.constant 0 : i32
    return %c0_i32, %c0_i32_0 : i32, i32
  }
  func.func @transform_3(%arg0: i32) -> (i32, i32) {
    %c0_i32 = arith.constant 0 : i32
    %c0_i32_0 = arith.constant 0 : i32
    %c0_i32_1 = arith.constant 0 : i32
    return %c0_i32, %c0_i32_0 : i32, i32
  }
  func.func @transform_4(%arg0: i32) -> (i32, i32) {
    %c0_i32 = arith.constant 0 : i32
    %c0_i32_0 = arith.constant 0 : i32
    %c0_i32_1 = arith.constant 0 : i32
    return %c0_i32, %c0_i32_0 : i32, i32
  }
  func.func @transform_5(%arg0: i32) -> (i32, i32) {
    %c0_i32 = arith.constant 0 : i32
    %c0_i32_0 = arith.constant 0 : i32
    %c0_i32_1 = arith.constant 0 : i32
    return %c0_i32, %c0_i32_0 : i32, i32
  }
  func.func @transform_6(%arg0: i32) -> (i32, i32) {
    %c0_i32 = arith.constant 0 : i32
    %c0_i32_0 = arith.constant 0 : i32
    %c0_i32_1 = arith.constant 0 : i32
    return %c0_i32, %c0_i32_0 : i32, i32
  }
  func.func @transform_7(%arg0: i32) -> (i32, i32) {
    %c0_i32 = arith.constant 0 : i32
    %c0_i32_0 = arith.constant 0 : i32
    return %arg0, %c0_i32 : i32, i32
  }
}

</mosaic_0001>

<llo_original>
// kernel: tpu_custom_call.1
$region0: #{tpu_custom_call.1}
  #allocation0 [shape = 'u32[]', space=smem, size = 0x4, offset = 0x4, fixed_abs, tag = 'smem constant byte address 0x4 - core index']
  #allocation1 [shape = 'u32[144,128]{1,0:T(1,128)}', space=vmem, size = 0x12000, scoped, tag = 'internal scratch']
  %s0 = inlined_call_operand.hbm [shape: f32[2,256], index: 0, kind: input, shape index: {}]
  %s1 = inlined_call_operand.hbm [shape: f32[256,128], index: 1, kind: input, shape index: {}]
  %s2 = inlined_call_operand.vmem [shape: f32[1,128], index: 2, kind: input, shape index: {}]
  %s3 = inlined_call_operand.hbm [shape: f32[128,128], index: 3, kind: input, shape index: {}]
  %s4 = inlined_call_operand.vmem [shape: f32[1,128], index: 4, kind: input, shape index: {}]
  %s5 = inlined_call_operand.hbm [shape: f32[128,256], index: 5, kind: input, shape index: {}]
  %s6 = inlined_call_operand.vmem [shape: f32[1,256], index: 6, kind: input, shape index: {}]
  %s7 = inlined_call_operand.hbm [shape: f32[2,256], index: 7, kind: output, shape index: {}]
  %s8 = sld [smem:[#allocation0]]
  $region54: #{tpu_custom_call.1} parent=0
    _
  %s10 = ssub.s32 1, %s8
  %s11 = scalar_select 0, %s10, %s8
  $region1: #{tpu_custom_call.1} parent=0
    #allocation2 [shape = 'u8[2048]{0}', space=vmem, size = 0x800, scoped, tag = 'input window, operand 0, single buffered']
    #allocation3 [shape = 's32[1]{0}', space=sflag, size = 0x4, scoped, tag = 'scoped memory for tpu_custom_call.1']
    #allocation4 [shape = 's32[1]{0}', space=sflag, size = 0x4, scoped, tag = 'scoped memory for tpu_custom_call.1']
    #allocation5 [shape = 'u8[131072]{0}', space=vmem, size = 0x20000, scoped, tag = 'input window, operand 1, single buffered']
    #allocation6 [shape = 's32[1]{0}', space=sflag, size = 0x4, scoped, tag = 'scoped memory for tpu_custom_call.1']
    #allocation7 [shape = 'u8[65536]{0}', space=vmem, size = 0x10000, scoped, tag = 'input window, operand 3, single buffered']
    #allocation8 [shape = 'u8[131072]{0}', space=vmem, size = 0x20000, scoped, tag = 'input window, operand 5, single buffered']
    #allocation9 [shape = 's32[1]{0}', space=sflag, size = 0x4, scoped, tag = 'scoped memory for tpu_custom_call.1']
    #allocation10 [shape = 'u8[2048]{0}', space=vmem, size = 0x800, scoped, tag = 'output window, operand 0, single buffered']
    %12 = vsyncpa [#allocation3], 0
    %13 = vsyncpa [#allocation6], 0
    %14 = vsyncpa [#allocation9], 0
    %15 = vsyncpa [#allocation4], 0
    // Predicated region
    $region2: #{tpu_custom_call.1} parent=1 // pred_check
      _
    $region3: #{tpu_custom_call.1} parent=1 // pred_check_branch
      %17 = sbr.rel (0) target = $region5
    $region4: #{tpu_custom_call.1} parent=1 // pred_region
      %s19 = ssub.s32 64, 64
      %20 = vsyncadd [#allocation3], %s19
      %s22 = sshll.u32 [#allocation2], 4
      %s23 = int_to_ptr.vmem [resolvable:$true] %s22
      %25 = dma.hbm_to_vmem [thread:$0]  %s0, 64, %s23, [#allocation3]
    $region5: #{tpu_custom_call.1} parent=1 // pred_fallthru
      _
    // Predicated region
    $region6: #{tpu_custom_call.1} parent=1 // pred_check
      _
    $region7: #{tpu_custom_call.1} parent=1 // pred_check_branch
      %27 = sbr.rel (0) target = $region9
    $region8: #{tpu_custom_call.1} parent=1 // pred_region
      %s29 = ssub.s32 4096, 4096
      %30 = vsyncadd [#allocation6], %s29
      %s31 = sshll.u32 [#allocation5], 4
      %s32 = int_to_ptr.vmem [resolvable:$true] %s31
      %37 = dma.hbm_to_vmem [thread:$0]  %s1, 4096, %s32, [#allocation6], 128, 128, 8
    $region9: #{tpu_custom_call.1} parent=1 // pred_fallthru
      _
    // Predicated region
    $region10: #{tpu_custom_call.1} parent=1 // pred_check
      _
    $region11: #{tpu_custom_call.1} parent=1 // pred_check_branch
      %39 = sbr.rel (0) target = $region13
    $region12: #{tpu_custom_call.1} parent=1 // pred_region
      _
    $region13: #{tpu_custom_call.1} parent=1 // pred_fallthru
      _
    // Predicated region
    $region14: #{tpu_custom_call.1} parent=1 // pred_check
      _
    $region15: #{tpu_custom_call.1} parent=1 // pred_check_branch
      %41 = sbr.rel (0) target = $region17
    $region16: #{tpu_custom_call.1} parent=1 // pred_region
      %s43 = ssub.s32 2048, 2048
      %44 = vsyncadd [#allocation6], %s43
      %s45 = sshll.u32 [#allocation7], 4
      %s46 = int_to_ptr.vmem [resolvable:$true] %s45
      %51 = dma.hbm_to_vmem [thread:$0]  %s3, 2048, %s46, [#allocation6], 128, 128, 8
    $region17: #{tpu_custom_call.1} parent=1 // pred_fallthru
      _
    // Predicated region
    $region18: #{tpu_custom_call.1} parent=1 // pred_check
      _
    $region19: #{tpu_custom_call.1} parent=1 // pred_check_branch
      %53 = sbr.rel (0) target = $region21
    $region20: #{tpu_custom_call.1} parent=1 // pred_region
      _
    $region21: #{tpu_custom_call.1} parent=1 // pred_fallthru
      _
    // Predicated region
    $region22: #{tpu_custom_call.1} parent=1 // pred_check
      _
    $region23: #{tpu_custom_call.1} parent=1 // pred_check_branch
      %55 = sbr.rel (0) target = $region25
    $region24: #{tpu_custom_call.1} parent=1 // pred_region
      %s57 = ssub.s32 4096, 4096
      %58 = vsyncadd [#allocation9], %s57
      %s59 = sshll.u32 [#allocation8], 4
      %s60 = int_to_ptr.vmem [resolvable:$true] %s59
      %65 = dma.hbm_to_vmem [thread:$0]  %s5, 4096, %s60, [#allocation9], 256, 256, 16
    $region25: #{tpu_custom_call.1} parent=1 // pred_fallthru
      _
    // Predicated region
    $region26: #{tpu_custom_call.1} parent=1 // pred_check
      _
    $region27: #{tpu_custom_call.1} parent=1 // pred_check_branch
      %67 = sbr.rel (0) target = $region29
    $region28: #{tpu_custom_call.1} parent=1 // pred_region
      _
    $region29: #{tpu_custom_call.1} parent=1 // pred_fallthru
      _
    // Predicated region
    $region30: #{tpu_custom_call.1} parent=1 // pred_check
      _
    $region31: #{tpu_custom_call.1} parent=1 // pred_check_branch
      %69 = sbr.rel (0) target = $region33
    $region32: #{tpu_custom_call.1} parent=1 // pred_region
      %70 = dma.done [#allocation3], 64
    $region33: #{tpu_custom_call.1} parent=1 // pred_fallthru
      _
    // Predicated region
    $region34: #{tpu_custom_call.1} parent=1 // pred_check
      _
    $region35: #{tpu_custom_call.1} parent=1 // pred_check_branch
      %72 = sbr.rel (0) target = $region37
    $region36: #{tpu_custom_call.1} parent=1 // pred_region
      %73 = dma.done [#allocation6], 4096
    $region37: #{tpu_custom_call.1} parent=1 // pred_fallthru
      _
    // Predicated region
    $region38: #{tpu_custom_call.1} parent=1 // pred_check
      _
    $region39: #{tpu_custom_call.1} parent=1 // pred_check_branch
      %75 = sbr.rel (0) target = $region41
    $region40: #{tpu_custom_call.1} parent=1 // pred_region
      %76 = dma.done [#allocation6], 2048
    $region41: #{tpu_custom_call.1} parent=1 // pred_fallthru
      _
    // Predicated region
    $region42: #{tpu_custom_call.1} parent=1 // pred_check
      _
    $region43: #{tpu_custom_call.1} parent=1 // pred_check_branch
      %78 = sbr.rel (0) target = $region45
    $region44: #{tpu_custom_call.1} parent=1 // pred_region
      %79 = dma.done [#allocation9], 4096
    $region45: #{tpu_custom_call.1} parent=1 // pred_fallthru
      _
    %v80 = vld [vmem:[#allocation5] sm:$0xff]
    %v81 = vld [vmem:[#allocation5 + $0x8] sm:$0xff]
    %v82 = vld [vmem:[#allocation5 + $0x10] sm:$0xff]
    %v83 = vld [vmem:[#allocation5 + $0x18] sm:$0xff]
    %v84 = vld [vmem:[#allocation5 + $0x20] sm:$0xff]
    %v85 = vld [vmem:[#allocation5 + $0x28] sm:$0xff]
    %v86 = vld [vmem:[#allocation5 + $0x30] sm:$0xff]
    %v87 = vld [vmem:[#allocation5 + $0x38] sm:$0xff]
    %v88 = vld [vmem:[#allocation5 + $0x40] sm:$0xff]
    %v89 = vld [vmem:[#allocation5 + $0x48] sm:$0xff]
    %v90 = vld [vmem:[#allocation5 + $0x50] sm:$0xff]
    %v91 = vld [vmem:[#allocation5 + $0x58] sm:$0xff]
    %v92 = vld [vmem:[#allocation5 + $0x60] sm:$0xff]
    %v93 = vld [vmem:[#allocation5 + $0x68] sm:$0xff]
    %v94 = vld [vmem:[#allocation5 + $0x70] sm:$0xff]
    %v95 = vld [vmem:[#allocation5 + $0x78] sm:$0xff]
    %v96 = vld [vmem:[#allocation5 + $0x80] sm:$0xff]
    %v97 = vld [vmem:[#allocation5 + $0x88] sm:$0xff]
    %v98 = vld [vmem:[#allocation5 + $0x90] sm:$0xff]
    %v99 = vld [vmem:[#allocation5 + $0x98] sm:$0xff]
    %v100 = vld [vmem:[#allocation5 + $0xa0] sm:$0xff]
    %v101 = vld [vmem:[#allocation5 + $0xa8] sm:$0xff]
    %v102 = vld [vmem:[#allocation5 + $0xb0] sm:$0xff]
    %v103 = vld [vmem:[#allocation5 + $0xb8] sm:$0xff]
    %v104 = vld [vmem:[#allocation5 + $0xc0] sm:$0xff]
    %v105 = vld [vmem:[#allocation5 + $0xc8] sm:$0xff]
    %v106 = vld [vmem:[#allocation5 + $0xd0] sm:$0xff]
    %v107 = vld [vmem:[#allocation5 + $0xd8] sm:$0xff]
    %v108 = vld [vmem:[#allocation5 + $0xe0] sm:$0xff]
    %v109 = vld [vmem:[#allocation5 + $0xe8] sm:$0xff]
    %v110 = vld [vmem:[#allocation5 + $0xf0] sm:$0xff]
    %v111 = vld [vmem:[#allocation5 + $0xf8] sm:$0xff]
    %v112 = vld [vmem:[#allocation2] sm:$0xf]
    %v113 = vld [vmem:[%s2] sm:$0x1]
    %v115 = vlaneseq
    %v116 = vshrl.u32 %v115, 7
    %v117 = vsub.s32 0, %v116
    %v118 = vrot.slane %v113, %v117
    %v122 = vunpack.c.l.s4 1983009808
    %v123 = vunpack.c.0.s8 %v122
    %v124 = vlaneseq
    %v125 = vshrl.u32 %v124, 7
    %v126 = vsub.s32 %v123, %v125
    %v127 = vrot.slane %v112, %v126
    %v128 = vcombine.high %v127, %v127
    %131 = vmatprep.subr.mxu0 0.0
    %132 = vmatpush1.msra.mxu0 %v80
    %133 = vmatprep.subr.mxu0 0.0
    %134 = vmatpush1.msra.mxu0 %v81
    %135 = vmatprep.subr.mxu0 0.0
    %136 = vmatpush1.msra.mxu0 %v82
    %137 = vmatprep.subr.mxu0 0.0
    %138 = vmatpush1.msra.mxu0 %v83
    %139 = vmatprep.subr.mxu0 0.0
    %140 = vmatpush1.msra.mxu0 %v84
    %141 = vmatprep.subr.mxu0 0.0
    %142 = vmatpush1.msra.mxu0 %v85
    %143 = vmatprep.subr.mxu0 0.0
    %144 = vmatpush1.msra.mxu0 %v86
    %145 = vmatprep.subr.mxu0 0.0
    %146 = vmatpush1.msra.mxu0 %v87
    %147 = vmatprep.subr.mxu0 0.0
    %148 = vmatpush1.msra.mxu0 %v88
    %149 = vmatprep.subr.mxu0 0.0
    %150 = vmatpush1.msra.mxu0 %v89
    %151 = vmatprep.subr.mxu0 0.0
    %152 = vmatpush1.msra.mxu0 %v90
    %153 = vmatprep.subr.mxu0 0.0
    %154 = vmatpush1.msra.mxu0 %v91
    %155 = vmatprep.subr.mxu0 0.0
    %156 = vmatpush1.msra.mxu0 %v92
    %157 = vmatprep.subr.mxu0 0.0
    %158 = vmatpush1.msra.mxu0 %v93
    %159 = vmatprep.subr.mxu0 0.0
    %160 = vmatpush1.msra.mxu0 %v94
    %161 = vmatprep.subr.mxu0 0.0
    %162 = vmatpush1.msra.mxu0 %v95
    %163 = vmatprep.subr.mxu0 0.0
    %164 = vmatpush1.msra.mxu0 %v96
    %165 = vmatprep.subr.mxu0 0.0
    %166 = vmatpush1.msra.mxu0 %v97
    %167 = vmatprep.subr.mxu0 0.0
    %168 = vmatpush1.msra.mxu0 %v98
    %169 = vmatprep.subr.mxu0 0.0
    %170 = vmatpush1.msra.mxu0 %v99
    %171 = vmatprep.subr.mxu0 0.0
    %172 = vmatpush1.msra.mxu0 %v100
    %173 = vmatprep.subr.mxu0 0.0
    %174 = vmatpush1.msra.mxu0 %v101
    %175 = vmatprep.subr.mxu0 0.0
    %176 = vmatpush1.msra.mxu0 %v102
    %177 = vmatprep.subr.mxu0 0.0
    %178 = vmatpush1.msra.mxu0 %v103
    %179 = vmatprep.subr.mxu0 0.0
    %180 = vmatpush1.msra.mxu0 %v104
    %181 = vmatprep.subr.mxu0 0.0
    %182 = vmatpush1.msra.mxu0 %v105
    %183 = vmatprep.subr.mxu0 0.0
    %184 = vmatpush1.msra.mxu0 %v106
    %185 = vmatprep.subr.mxu0 0.0
    %186 = vmatpush1.msra.mxu0 %v107
    %187 = vmatprep.subr.mxu0 0.0
    %188 = vmatpush1.msra.mxu0 %v108
    %189 = vmatprep.subr.mxu0 0.0
    %190 = vmatpush1.msra.mxu0 %v109
    %191 = vmatprep.subr.mxu0 0.0
    %192 = vmatpush1.msra.mxu0 %v110
    %193 = vmatprep.subr.mxu0 0.0
    %194 = vmatpush1.msra.mxu0 %v111
    %195 = vmatprep.mubr.f32.mxu0 %v128
    %196 = vmatmul.mubr.f32.gmra.mrb[0].mxu0 %v127
    %v197 = vpop.f32.mrb[0].mxu0
    %v198 = vadd.f32 %v118, %v197
    %v199 = vpop.f32.mrb[0].mxu0
    %200 = vdwg.mxu0
    %v201 = vld [vmem:[#allocation7] sm:$0xff]
    %v202 = vld [vmem:[#allocation7 + $0x8] sm:$0xff]
    %v203 = vld [vmem:[#allocation7 + $0x10] sm:$0xff]
    %v204 = vld [vmem:[#allocation7 + $0x18] sm:$0xff]
    %v205 = vld [vmem:[#allocation7 + $0x20] sm:$0xff]
    %v206 = vld [vmem:[#allocation7 + $0x28] sm:$0xff]
    %v207 = vld [vmem:[#allocation7 + $0x30] sm:$0xff]
    %v208 = vld [vmem:[#allocation7 + $0x38] sm:$0xff]
    %v209 = vld [vmem:[#allocation7 + $0x40] sm:$0xff]
    %v210 = vld [vmem:[#allocation7 + $0x48] sm:$0xff]
    %v211 = vld [vmem:[#allocation7 + $0x50] sm:$0xff]
    %v212 = vld [vmem:[#allocation7 + $0x58] sm:$0xff]
    %v213 = vld [vmem:[#allocation7 + $0x60] sm:$0xff]
    %v214 = vld [vmem:[#allocation7 + $0x68] sm:$0xff]
    %v215 = vld [vmem:[#allocation7 + $0x70] sm:$0xff]
    %v216 = vld [vmem:[#allocation7 + $0x78] sm:$0xff]
    %v217 = vld [vmem:[%s4] sm:$0x1]
    %v219 = vlaneseq
    %v220 = vshrl.u32 %v219, 7
    %v221 = vsub.s32 0, %v220
    %v222 = vrot.slane %v217, %v221
    %224 = vmatprep.subr.mxu0 0.0
    %225 = vmatpush1.msra.mxu0 %v201
    %226 = vmatprep.subr.mxu0 0.0
    %227 = vmatpush1.msra.mxu0 %v202
    %228 = vmatprep.subr.mxu0 0.0
    %229 = vmatpush1.msra.mxu0 %v203
    %230 = vmatprep.subr.mxu0 0.0
    %231 = vmatpush1.msra.mxu0 %v204
    %232 = vmatprep.subr.mxu0 0.0
    %233 = vmatpush1.msra.mxu0 %v205
    %234 = vmatprep.subr.mxu0 0.0
    %235 = vmatpush1.msra.mxu0 %v206
    %236 = vmatprep.subr.mxu0 0.0
    %237 = vmatpush1.msra.mxu0 %v207
    %238 = vmatprep.subr.mxu0 0.0
    %239 = vmatpush1.msra.mxu0 %v208
    %240 = vmatprep.subr.mxu0 0.0
    %241 = vmatpush1.msra.mxu0 %v209
    %242 = vmatprep.subr.mxu0 0.0
    %243 = vmatpush1.msra.mxu0 %v210
    %244 = vmatprep.subr.mxu0 0.0
    %245 = vmatpush1.msra.mxu0 %v211
    %246 = vmatprep.subr.mxu0 0.0
    %247 = vmatpush1.msra.mxu0 %v212
    %248 = vmatprep.subr.mxu0 0.0
    %249 = vmatpush1.msra.mxu0 %v213
    %250 = vmatprep.subr.mxu0 0.0
    %251 = vmatpush1.msra.mxu0 %v214
    %252 = vmatprep.subr.mxu0 0.0
    %253 = vmatpush1.msra.mxu0 %v215
    %254 = vmatprep.subr.mxu0 0.0
    %255 = vmatpush1.msra.mxu0 %v216
    %256 = vmatprep.subr.mxu0 0.0
    %257 = vmatpush1.msra.mxu0 0.0
    %258 = vmatprep.subr.mxu0 0.0
    %259 = vmatpush1.msra.mxu0 0.0
    %260 = vmatprep.subr.mxu0 0.0
    %261 = vmatpush1.msra.mxu0 0.0
    %262 = vmatprep.subr.mxu0 0.0
    %263 = vmatpush1.msra.mxu0 0.0
    %264 = vmatprep.subr.mxu0 0.0
    %265 = vmatpush1.msra.mxu0 0.0
    %266 = vmatprep.subr.mxu0 0.0
    %267 = vmatpush1.msra.mxu0 0.0
    %268 = vmatprep.subr.mxu0 0.0
    %269 = vmatpush1.msra.mxu0 0.0
    %270 = vmatprep.subr.mxu0 0.0
    %271 = vmatpush1.msra.mxu0 0.0
    %272 = vmatprep.subr.mxu0 0.0
    %273 = vmatpush1.msra.mxu0 0.0
    %274 = vmatprep.subr.mxu0 0.0
    %275 = vmatpush1.msra.mxu0 0.0
    %276 = vmatprep.subr.mxu0 0.0
    %277 = vmatpush1.msra.mxu0 0.0
    %278 = vmatprep.subr.mxu0 0.0
    %279 = vmatpush1.msra.mxu0 0.0
    %280 = vmatprep.subr.mxu0 0.0
    %281 = vmatpush1.msra.mxu0 0.0
    %282 = vmatprep.subr.mxu0 0.0
    %283 = vmatpush1.msra.mxu0 0.0
    %284 = vmatprep.subr.mxu0 0.0
    %285 = vmatpush1.msra.mxu0 0.0
    %286 = vmatprep.subr.mxu0 0.0
    %287 = vmatpush1.msra.mxu0 0.0
    %288 = vmatprep.mubr.f32.mxu0 0.0
    %289 = vmatmul.mubr.f32.gmra.mrb[0].mxu0 %v198
    %v290 = vpop.f32.mrb[0].mxu0
    %v291 = vadd.f32 %v222, %v290
    %v292 = vpop.f32.mrb[0].mxu0
    %293 = vdwg.mxu0
    %vm294 = vcmp.ge.f32.partialorder %v291, 0.0
    %v295 = vmul.f32 %v291, 0.2
    %v296 = vsel %vm294, %v291, %v295
    %v297 = vld [vmem:[#allocation8] sm:$0xff]
    %v298 = vld [vmem:[#allocation8 + $0x8] sm:$0xff]
    %v299 = vld [vmem:[#allocation8 + $0x10] sm:$0xff]
    %v300 = vld [vmem:[#allocation8 + $0x18] sm:$0xff]
    %v301 = vld [vmem:[#allocation8 + $0x20] sm:$0xff]
    %v302 = vld [vmem:[#allocation8 + $0x28] sm:$0xff]
    %v303 = vld [vmem:[#allocation8 + $0x30] sm:$0xff]
    %v304 = vld [vmem:[#allocation8 + $0x38] sm:$0xff]
    %v305 = vld [vmem:[#allocation8 + $0x40] sm:$0xff]
    %v306 = vld [vmem:[#allocation8 + $0x48] sm:$0xff]
    %v307 = vld [vmem:[#allocation8 + $0x50] sm:$0xff]
    %v308 = vld [vmem:[#allocation8 + $0x58] sm:$0xff]
    %v309 = vld [vmem:[#allocation8 + $0x60] sm:$0xff]
    %v310 = vld [vmem:[#allocation8 + $0x68] sm:$0xff]
    %v311 = vld [vmem:[#allocation8 + $0x70] sm:$0xff]
    %v312 = vld [vmem:[#allocation8 + $0x78] sm:$0xff]
    %v313 = vld [vmem:[#allocation8 + $0x80] sm:$0xff]
    %v314 = vld [vmem:[#allocation8 + $0x88] sm:$0xff]
    %v315 = vld [vmem:[#allocation8 + $0x90] sm:$0xff]
    %v316 = vld [vmem:[#allocation8 + $0x98] sm:$0xff]
    %v317 = vld [vmem:[#allocation8 + $0xa0] sm:$0xff]
    %v318 = vld [vmem:[#allocation8 + $0xa8] sm:$0xff]
    %v319 = vld [vmem:[#allocation8 + $0xb0] sm:$0xff]
    %v320 = vld [vmem:[#allocation8 + $0xb8] sm:$0xff]
    %v321 = vld [vmem:[#allocation8 + $0xc0] sm:$0xff]
    %v322 = vld [vmem:[#allocation8 + $0xc8] sm:$0xff]
    %v323 = vld [vmem:[#allocation8 + $0xd0] sm:$0xff]
    %v324 = vld [vmem:[#allocation8 + $0xd8] sm:$0xff]
    %v325 = vld [vmem:[#allocation8 + $0xe0] sm:$0xff]
    %v326 = vld [vmem:[#allocation8 + $0xe8] sm:$0xff]
    %v327 = vld [vmem:[#allocation8 + $0xf0] sm:$0xff]
    %v328 = vld [vmem:[#allocation8 + $0xf8] sm:$0xff]
    %v329 = vld [vmem:[%s6] sm:$0x3]
    %v331 = vlaneseq
    %v332 = vshrl.u32 %v331, 7
    %v333 = vsub.s32 0, %v332
    %v334 = vrot.slane %v329, %v333
    %v335 = vlaneseq
    %v336 = vshrl.u32 %v335, 7
    %v337 = vsub.s32 1, %v336
    %v338 = vrot.slane %v329, %v337
    %341 = vmatprep.subr.mxu0 %v298
    %342 = vmatpush1.msra.mxu0 %v297
    %343 = vmatprep.subr.mxu0 %v300
    %344 = vmatpush1.msra.mxu0 %v299
    %345 = vmatprep.subr.mxu0 %v302
    %346 = vmatpush1.msra.mxu0 %v301
    %347 = vmatprep.subr.mxu0 %v304
    %348 = vmatpush1.msra.mxu0 %v303
    %349 = vmatprep.subr.mxu0 %v306
    %350 = vmatpush1.msra.mxu0 %v305
    %351 = vmatprep.subr.mxu0 %v308
    %352 = vmatpush1.msra.mxu0 %v307
    %353 = vmatprep.subr.mxu0 %v310
    %354 = vmatpush1.msra.mxu0 %v309
    %355 = vmatprep.subr.mxu0 %v312
    %356 = vmatpush1.msra.mxu0 %v311
    %357 = vmatprep.subr.mxu0 %v314
    %358 = vmatpush1.msra.mxu0 %v313
    %359 = vmatprep.subr.mxu0 %v316
    %360 = vmatpush1.msra.mxu0 %v315
    %361 = vmatprep.subr.mxu0 %v318
    %362 = vmatpush1.msra.mxu0 %v317
    %363 = vmatprep.subr.mxu0 %v320
    %364 = vmatpush1.msra.mxu0 %v319
    %365 = vmatprep.subr.mxu0 %v322
    %366 = vmatpush1.msra.mxu0 %v321
    %367 = vmatprep.subr.mxu0 %v324
    %368 = vmatpush1.msra.mxu0 %v323
    %369 = vmatprep.subr.mxu0 %v326
    %370 = vmatpush1.msra.mxu0 %v325
    %371 = vmatprep.subr.mxu0 %v328
    %372 = vmatpush1.msra.mxu0 %v327
    %373 = vmatprep.subr.mxu0 0.0
    %374 = vmatpush1.msra.mxu0 0.0
    %375 = vmatprep.subr.mxu0 0.0
    %376 = vmatpush1.msra.mxu0 0.0
    %377 = vmatprep.subr.mxu0 0.0
    %378 = vmatpush1.msra.mxu0 0.0
    %379 = vmatprep.subr.mxu0 0.0
    %380 = vmatpush1.msra.mxu0 0.0
    %381 = vmatprep.subr.mxu0 0.0
    %382 = vmatpush1.msra.mxu0 0.0
    %383 = vmatprep.subr.mxu0 0.0
    %384 = vmatpush1.msra.mxu0 0.0
    %385 = vmatprep.subr.mxu0 0.0
    %386 = vmatpush1.msra.mxu0 0.0
    %387 = vmatprep.subr.mxu0 0.0
    %388 = vmatpush1.msra.mxu0 0.0
    %389 = vmatprep.subr.mxu0 0.0
    %390 = vmatpush1.msra.mxu0 0.0
    %391 = vmatprep.subr.mxu0 0.0
    %392 = vmatpush1.msra.mxu0 0.0
    %393 = vmatprep.subr.mxu0 0.0
    %394 = vmatpush1.msra.mxu0 0.0
    %395 = vmatprep.subr.mxu0 0.0
    %396 = vmatpush1.msra.mxu0 0.0
    %397 = vmatprep.subr.mxu0 0.0
    %398 = vmatpush1.msra.mxu0 0.0
    %399 = vmatprep.subr.mxu0 0.0
    %400 = vmatpush1.msra.mxu0 0.0
    %401 = vmatprep.subr.mxu0 0.0
    %402 = vmatpush1.msra.mxu0 0.0
    %403 = vmatprep.subr.mxu0 0.0
    %404 = vmatpush1.msra.mxu0 0.0
    %405 = vmatprep.mubr.f32.mxu0 0.0
    %406 = vmatmul.mubr.f32.gmra.mrb[0].mxu0 %v296
    %v407 = vpop.f32.mrb[0].mxu0
    %v408 = vadd.f32 %v334, %v407
    %v409 = vpop.f32.mrb[0].mxu0
    %v410 = vadd.f32 %v338, %v409
    %411 = vdwg.mxu0
    %v414 = vcombine.low %v408, %v410
    %v416 = vunpack.c.l.s4 1983009808
    %v417 = vunpack.c.0.s8 %v416
    %v418 = vlaneseq
    %v419 = vshrl.u32 %v418, 7
    %v420 = vsub.s32 %v417, %v419
    %v421 = vrot.slane %v414, %v420
    %423 = vst [vmem:[#allocation10] sm:$0xf] %v421
    // Predicated region
    $region46: #{tpu_custom_call.1} parent=1 // pred_check
      _
    $region47: #{tpu_custom_call.1} parent=1 // pred_check_branch
      %425 = sbr.rel (0) target = $region49
    $region48: #{tpu_custom_call.1} parent=1 // pred_region
      %s427 = ssub.s32 64, 64
      %428 = vsyncadd [#allocation4], %s427
      %s430 = sshll.u32 [#allocation10], 4
      %s431 = int_to_ptr.vmem [resolvable:$true] %s430
      %433 = dma.vmem_to_hbm [thread:$0]  %s431, 64, %s7, [#allocation4]
    $region49: #{tpu_custom_call.1} parent=1 // pred_fallthru
      _
    // Predicated region
    $region50: #{tpu_custom_call.1} parent=1 // pred_check
      _
    $region51: #{tpu_custom_call.1} parent=1 // pred_check_branch
      %435 = sbr.rel (0) target = $region53
    $region52: #{tpu_custom_call.1} parent=1 // pred_region
      %436 = dma.done [#allocation4], 64
    $region53: #{tpu_custom_call.1} parent=1 // pred_fallthru
      _
    %437 = vsyncpa [#allocation3], 1
    %438 = vsyncpa [#allocation6], 1
    %439 = vsyncpa [#allocation9], 1
    %440 = vsyncpa [#allocation4], 1

</llo_original>
